<compile_context>
chip_gen: v5e
topology: v5e:2x2
jax: 0.10.0
libtpu: 0.0.40
codegen_flags: <defaults>
</compile_context>

<pallas_src>
import functools

import jax
import jax.numpy as jnp
from jax.experimental import pallas as pl
from jax.experimental.pallas import tpu as pltpu


# Candidate lane widths (all multiples of 128), widest first.
_LANE_WIDTHS = (4096, 2048, 1024, 512, 256, 128)
_MiB = 1024 * 1024


def _temp_tanh_kernel(x_ref, o_ref, *, gain: float, compute_dtype):
    # hot path: elementwise gain * tanh(x) on the VMEM tile
    x = x_ref[...]
    if x.dtype != compute_dtype:          # static (trace-time) branch
        x = x.astype(compute_dtype)
    o_ref[...] = (gain * jnp.tanh(x)).astype(o_ref.dtype)


def _device_config():
    """Per-generation (block_bytes, vmem_limit_bytes, tensorcores, bf16_eup)."""
    try:
        kind = jax.devices()[0].device_kind.lower()
    except Exception:
        kind = ""
    if "v7" in kind:
        # 64 MiB VMEM/TC, 3.2 TB/s HBM, 2 TensorCores/chip.  Cap the block so
        # the 2-spec x 2-pipeline-buffer working set (16 MiB) stays well under
        # the 32 MiB scoped budget + Mosaic internal scratch.
        return 4 * _MiB, 32 * _MiB, 2, True
    if "v6" in kind:
        # 128 MiB physical VMEM, 1.4 TB/s HBM: big blocks amortize the
        # ~0.35us/grid-step overhead; raise scoped VMEM to 4*block + headroom.
        return 8 * _MiB, 48 * _MiB, 1, True
    if any(t in kind for t in ("v2", "v3", "v4", "v5")):
        # 128 MiB physical VMEM but only a 16 MiB *default* scoped budget:
        # blocks above ~4 MiB REQUIRE an explicit vmem_limit_bytes here.
        # No bf16 VPU/EUP -> transcendentals in f32.
        return 8 * _MiB, 48 * _MiB, 1, False
    # Unknown backend: conservative, still valid on every generation.
    return 4 * _MiB, 32 * _MiB, 1, False


def _pick_width(n_elems: int) -> int:
    for w in _LANE_WIDTHS:
        if n_elems % w == 0:
            return w
    return 128


def _run_2d(x2d, gain, orig_dtype, compute_dtype,
            block_bytes, vmem_limit, num_cores):
    rows, width = x2d.shape
    itemsize = jnp.dtype(orig_dtype).itemsize
    # Native sublane tile per dtype: 8 rows (32-bit), 16 (bf16/f16), 32 (int8).
    row_align = max(8, 8 * (4 // max(1, itemsize)))

    # Block rows: ~block_bytes per block, rounded to the sublane tile.
    tile_rows = max(row_align, block_bytes // (width * itemsize))
    tile_rows = (tile_rows // row_align) * row_align
    tile_rows = min(tile_rows, rows)

    # Megacore (v7x): guarantee >= num_cores blocks, rounded to a multiple of
    # num_cores, so the "parallel" grid axis shards across both TensorCores
    # with balanced work.
    if num_cores > 1 and rows >= num_cores * row_align:
        n_blocks = pl.cdiv(rows, tile_rows)
        n_blocks = pl.cdiv(max(n_blocks, num_cores), num_cores) * num_cores
        tile_rows = pl.cdiv(pl.cdiv(rows, n_blocks), row_align) * row_align
        tile_rows = min(tile_rows, rows)

    grid = (pl.cdiv(rows, tile_rows),)

    n = rows * width
    cost = pl.CostEstimate(
        flops=n,
        transcendentals=n,
        bytes_accessed=2 * n * itemsize,
    )

    return pl.pallas_call(
        functools.partial(
            _temp_tanh_kernel, gain=float(gain), compute_dtype=compute_dtype
        ),
        out_shape=jax.ShapeDtypeStruct((rows, width), orig_dtype),
        grid_spec=pltpu.PrefetchScalarGridSpec(
            num_scalar_prefetch=0,
            grid=grid,
            in_specs=[pl.BlockSpec((tile_rows, width), lambda i: (i, 0))],
            out_specs=pl.BlockSpec((tile_rows, width), lambda i: (i, 0)),
        ),
        compiler_params=pltpu.CompilerParams(
            dimension_semantics=("parallel",),
            vmem_limit_bytes=vmem_limit,
        ),
        cost_estimate=cost,
    )(x2d)


def temp_tanh(
    x: jax.Array,
    gain: float = 1.0,
    *,
    target_block_bytes: int | None = None,
    min_pallas_elems: int = 65536,
) -> jax.Array:
    """gain * tanh(x), computed in a Pallas TPU kernel (large inputs)."""
    orig_shape = x.shape
    orig_dtype = x.dtype
    n = x.size

    if n == 0:
        return x

    block_bytes, vmem_limit, num_cores, bf16_eup = _device_config()
    if target_block_bytes is not None:
        block_bytes = int(target_block_bytes)

    def _xla(v):
        return (gain * jnp.tanh(v.astype(jnp.float32))).astype(orig_dtype)

    # Tiny inputs: pallas_call launch + pipeline overhead dominates; plain
    # fused XLA is faster.  (Demo forces the kernel path for n >= 128.)
    if n < max(min_pallas_elems, 128):
        return _xla(x)

    # Compute dtype: bf16 stays native where the EUP has a bf16 path
    # (v6e/v7x).  f16 and everything else upcasts to f32 — there is no f16
    # VPU/EUP path, and DMA bytes are fixed by the I/O dtype anyway.
    compute_dtype = jnp.float32
    if orig_dtype == jnp.bfloat16 and bf16_eup:
        compute_dtype = jnp.bfloat16

    x_flat = jnp.ravel(x)
    n_main = (n // 128) * 128          # lane-aligned prefix handled in-kernel
    main = x_flat if n_main == n else x_flat[:n_main]

    width = _pick_width(n_main)
    rows = n_main // width

    out_main = _run_2d(
        main.reshape(rows, width), gain, orig_dtype, compute_dtype,
        block_bytes, vmem_limit, num_cores,
    )
    out_flat = out_main.reshape(-1)

    if n_main != n:
        # Rare ragged fallback: the <128-element tail is plain XLA; no
        # full-array pad + trailing-slice round trip through HBM.
        out_tail = _xla(x_flat[n_main:])
        out_flat = jnp.concatenate([out_flat, out_tail])

    return out_flat.reshape(orig_shape)


if __name__ == "__main__":
    key = jax.random.PRNGKey(0)
    k1, k2, k3, k4 = jax.random.split(key, 4)
    gain = 2.5

    # Small NCHW demo shape from the module spec; force the Pallas path.
    x_small = jax.random.normal(k1, (2, 4, 16, 16), dtype=jnp.float32)
    y_small = temp_tanh(x_small, gain=gain, min_pallas_elems=0)
    jax.block_until_ready(y_small)
    ref_small = gain * jnp.tanh(x_small)
    assert y_small.shape == x_small.shape and y_small.dtype == x_small.dtype
    assert jnp.allclose(y_small, ref_small, atol=1e-5, rtol=1e-5)

    # Larger input: multi-block streaming path on every generation
    # (grid >= 2 blocks; 4 balanced blocks across both TCs on v7x).
    x_big = jax.random.normal(k2, (16, 16, 128, 128), dtype=jnp.float32)
    y_big = temp_tanh(x_big, gain=gain)
    jax.block_until_ready(y_big)
    ref_big = gain * jnp.tanh(x_big)
    assert y_big.shape == x_big.shape and y_big.dtype == x_big.dtype
    assert jnp.allclose(y_big, ref_big, atol=1e-5, rtol=1e-5)

    # bf16 input: native bf16 compute on v6e/v7x, f32 on older chips.
    x_bf16 = jax.random.normal(k3, (4, 8, 64, 64), dtype=jnp.bfloat16)
    y_bf16 = temp_tanh(x_bf16, gain=gain, min_pallas_elems=0)
    jax.block_until_ready(y_bf16)
    ref_bf16 = gain * jnp.tanh(x_bf16.astype(jnp.float32))
    assert y_bf16.shape == x_bf16.shape and y_bf16.dtype == x_bf16.dtype
    assert jnp.allclose(y_bf16.astype(jnp.float32), ref_bf16, atol=0.05, rtol=0.05)

    # Ragged element count (not a multiple of 128): kernel handles the
    # 128-aligned prefix, XLA handles the tiny tail.
    x_odd = jax.random.normal(k4, (3, 5, 7, 11), dtype=jnp.float32)
    y_odd = temp_tanh(x_odd, gain=gain, min_pallas_elems=0)
    jax.block_until_ready(y_odd)
    ref_odd = gain * jnp.tanh(x_odd)
    assert y_odd.shape == x_odd.shape and y_odd.dtype == x_odd.dtype
    assert jnp.allclose(y_odd, ref_odd, atol=1e-5, rtol=1e-5)

    print("KERNEL_OK")
</pallas_src>

<mosaic_0001>
module attributes {stable_mosaic.version = 11 : i64} {
  func.func @_temp_tanh_kernel(%arg0: i32, %arg1: memref<1x2048xf32, #tpu.memory_space<vmem>>, %arg2: memref<1x2048xf32, #tpu.memory_space<vmem>>) attributes {dimension_semantics = [#tpu.dimension_semantics<parallel>], iteration_bounds = array<i64: 1>, scalar_prefetch = 0 : i64, scratch_operands = 0 : i64, tpu.core_type = #tpu.core_type<tc>, window_params = [{transform_indices = @transform_0, window_bounds = array<i64: 1, 2048>}, {transform_indices = @transform_1, window_bounds = array<i64: 1, 2048>}]} {
    %c0 = arith.constant 0 : index
    %c0_0 = arith.constant 0 : index
    %0 = vector.load %arg1[%c0, %c0_0] : memref<1x2048xf32, #tpu.memory_space<vmem>>, vector<1x2048xf32>
    %1 = math.tanh %0 : vector<1x2048xf32>
    %cst = arith.constant 2.500000e+00 : f32
    %2 = vector.broadcast %cst : f32 to vector<1x2048xf32>
    %3 = arith.mulf %2, %1 : vector<1x2048xf32>
    %c0_1 = arith.constant 0 : index
    %c0_2 = arith.constant 0 : index
    %4 = vector.load %arg2[%c0_1, %c0_2] : memref<1x2048xf32, #tpu.memory_space<vmem>>, vector<1x2048xf32>
    tpu.vector_store %arg2[%c0_1, %c0_2], %3 {strides = array<i32>} : memref<1x2048xf32, #tpu.memory_space<vmem>>, vector<1x2048xf32>,
    return
  }
  func.func @transform_0(%arg0: i32) -> (i32, i32) {
    %c0_i32 = arith.constant 0 : i32
    %c0_i32_0 = arith.constant 0 : i32
    return %arg0, %c0_i32 : i32, i32
  }
  func.func @transform_1(%arg0: i32) -> (i32, i32) {
    %c0_i32 = arith.constant 0 : i32
    %c0_i32_0 = arith.constant 0 : i32
    return %arg0, %c0_i32 : i32, i32
  }
}

</mosaic_0001>

<llo_original>
// kernel: tpu_custom_call.1
$region0: #{tpu_custom_call.1}
  #allocation0 [shape = 'u32[]', space=smem, size = 0x4, offset = 0x4, fixed_abs, tag = 'smem constant byte address 0x4 - core index']
  #allocation1 [shape = 'u32[72,128]{1,0:T(1,128)}', space=vmem, size = 0x9000, scoped, tag = 'internal scratch']
  %s0 = inlined_call_operand.hbm [shape: f32[1,2048], index: 0, kind: input, shape index: {}]
  %s1 = inlined_call_operand.hbm [shape: f32[1,2048], index: 1, kind: output, shape index: {}]
  %s2 = sld [smem:[#allocation0]]
  $region18: #{tpu_custom_call.1} parent=0
    _
  %s4 = ssub.s32 1, %s2
  %s5 = scalar_select 0, %s4, %s2
  $region1: #{tpu_custom_call.1} parent=0
    #allocation2 [shape = 'u8[8192]{0}', space=vmem, size = 0x2000, scoped, tag = 'input window, operand 0, single buffered']
    #allocation3 [shape = 's32[1]{0}', space=sflag, size = 0x4, scoped, tag = 'scoped memory for tpu_custom_call.1']
    #allocation4 [shape = 's32[1]{0}', space=sflag, size = 0x4, scoped, tag = 'scoped memory for tpu_custom_call.1']
    #allocation5 [shape = 'u8[8192]{0}', space=vmem, size = 0x2000, scoped, tag = 'output window, operand 0, single buffered']
    %6 = vsyncpa [#allocation3], 0
    %7 = vsyncpa [#allocation4], 0
    // Predicated region
    $region2: #{tpu_custom_call.1} parent=1 // pred_check
      _
    $region3: #{tpu_custom_call.1} parent=1 // pred_check_branch
      %9 = sbr.rel (0) target = $region5
    $region4: #{tpu_custom_call.1} parent=1 // pred_region
      %11 = vsyncadd [#allocation3], 0
      %s13 = sshll.u32 %s0, 4
      %s14 = int_to_ptr.hbm [resolvable:$true] %s13
      %s15 = sshll.u32 [#allocation2], 4
      %s16 = int_to_ptr.vmem [resolvable:$true] %s15
      %18 = dma.hbm_to_vmem [thread:$0]  %s14, 256, %s16, [#allocation3]
    $region5: #{tpu_custom_call.1} parent=1 // pred_fallthru
      _
    // Predicated region
    $region6: #{tpu_custom_call.1} parent=1 // pred_check
      _
    $region7: #{tpu_custom_call.1} parent=1 // pred_check_branch
      %20 = sbr.rel (0) target = $region9
    $region8: #{tpu_custom_call.1} parent=1 // pred_region
      %22 = dma.done [#allocation3], 256
    $region9: #{tpu_custom_call.1} parent=1 // pred_fallthru
      _
    %v23 = vld [vmem:[#allocation2] sm:$0xff]
    %v24 = vld [vmem:[#allocation2 + $0x8] sm:$0xff]
    %v25 = vtanh.pop %v23
    %v26 = vtanh.pop %v24
    %v27 = vmul.f32 %v25, 2.5
    %v28 = vmul.f32 %v26, 2.5
    %29 = vst [vmem:[#allocation5] sm:$0xff] %v27
    %30 = vst [vmem:[#allocation5 + $0x8] sm:$0xff] %v28
    // Predicated region
    $region10: #{tpu_custom_call.1} parent=1 // pred_check
      _
    $region11: #{tpu_custom_call.1} parent=1 // pred_check_branch
      %32 = sbr.rel (0) target = $region13
    $region12: #{tpu_custom_call.1} parent=1 // pred_region
      %34 = vsyncadd [#allocation4], 0
      %s36 = sshll.u32 [#allocation5], 4
      %s37 = int_to_ptr.vmem [resolvable:$true] %s36
      %s38 = sshll.u32 %s1, 4
      %s39 = int_to_ptr.hbm [resolvable:$true] %s38
      %41 = dma.vmem_to_hbm [thread:$0]  %s37, 256, %s39, [#allocation4]
    $region13: #{tpu_custom_call.1} parent=1 // pred_fallthru
      _
    // Predicated region
    $region14: #{tpu_custom_call.1} parent=1 // pred_check
      _
    $region15: #{tpu_custom_call.1} parent=1 // pred_check_branch
      %43 = sbr.rel (0) target = $region17
    $region16: #{tpu_custom_call.1} parent=1 // pred_region
      %45 = dma.done [#allocation4], 256
    $region17: #{tpu_custom_call.1} parent=1 // pred_fallthru
      _
    %46 = vsyncpa [#allocation3], 1
    %47 = vsyncpa [#allocation4], 1

</llo_original>
